<compile_context>
chip_gen: v6e
topology: v6e:2x2x1
jax: 0.10.0
libtpu: 0.0.40
codegen_flags: <defaults>
</compile_context>

<pallas_src>
import jax
import jax.numpy as jnp
from jax.experimental import pallas as pl
from jax.experimental.pallas import tpu as pltpu


def decoder_kernel(x_ref, w1_ref, b1_ref, w2_ref, b2_ref, o_ref):
    # x arrives in its original dtype (f32); cast to bf16 in-kernel so the
    # wrapper does not spend an extra HBM pass on the cast.
    x = x_ref[...].astype(w1_ref.dtype)
    # (TILE_PB, 128) bf16 @ (128, 128) bf16 -> f32 accumulate on the MXU.
    h = jnp.dot(x, w1_ref[...], preferred_element_type=jnp.float32)
    h = jnp.tanh(h + b1_ref[...])               # f32 bias add + tanh (VPU/EUP)
    h = h.astype(w2_ref.dtype)                  # back to bf16 for 2nd MXU pass
    o = jnp.dot(h, w2_ref[...], preferred_element_type=jnp.float32)
    # Lane-dense (last dim = 128) store -> unmasked vst.
    o_ref[...] = (o + b2_ref[...]).astype(o_ref.dtype)


def prepare_decoder_params(w1, b1, w2, b2, compute_dtype=jnp.bfloat16,
                           lane_width=128):
    """One-time glue OUTSIDE the hot path.

    PyTorch stores weights as (out_features, in_features).  We transpose to the
    (in, out) MXU layout, cast to bf16, and *lane-pack*: since the 32-wide
    feature dim divides 128, we build block-diagonal weights (pack copies of W
    on the diagonal -> 128x128) and tile the biases to (1, 128) so every vreg
    lane is used by loads, matmuls and stores.

    Returns (pack, w1_blk, b1_blk, w2_blk, b2_blk).
    """
    H, D = w1.shape
    # Inherited from the reference module: linear2 consumes linear1's output,
    # which only type-checks when latent_size == hidden_size.
    assert D == H and w2.shape == (H, D), (
        "Decoder requires latent_size == hidden_size "
        f"(got w1 {w1.shape}, w2 {w2.shape})")

    pack = lane_width // D if (D < lane_width and lane_width % D == 0) else 1

    w1_t = w1.T.astype(jnp.float32)                       # (D, H)
    w2_t = w2.T.astype(jnp.float32)                       # (H, H)
    eye = jnp.eye(pack, dtype=jnp.float32)
    w1_blk = jnp.kron(eye, w1_t).astype(compute_dtype)    # (pack*D, pack*H)
    w2_blk = jnp.kron(eye, w2_t).astype(compute_dtype)    # (pack*H, pack*H)
    b1_blk = jnp.tile(b1.astype(jnp.float32), pack).reshape(1, pack * H)
    b2_blk = jnp.tile(b2.astype(jnp.float32), pack).reshape(1, pack * H)
    return pack, w1_blk, b1_blk, w2_blk, b2_blk


def decoder_forward(x, pack, w1_blk, b1_blk, w2_blk, b2_blk, *,
                    tile_pb=2048, out_dtype=jnp.float32):
    """x: (B, latent) f32/bf16.  Packed params from prepare_decoder_params.
    Returns (B, hidden) `out_dtype` (f32 default; bf16 halves write traffic)."""
    B, D = x.shape
    PD, PH = w1_blk.shape
    assert PD == pack * D, (
        f"x feature dim {D} incompatible with packed weights {w1_blk.shape}")
    H = PH // pack

    # Lane-pack the batch: (B, D) -> (Bp, pack*D).  Contiguous reshape (free).
    pad_rows = (-B) % pack
    if pad_rows:
        x = jnp.pad(x, ((0, pad_rows), (0, 0)))
    Bp = (B + pad_rows) // pack
    x_packed = x.reshape(Bp, PD)

    # Batch-tile selection (packed rows).  Sublane-aligned; keep >= 2 grid
    # steps when possible so v7x's two TensorCores both get work.
    tile_pb = max(8, (int(tile_pb) // 8) * 8)
    if Bp <= 8:
        tile_pb = Bp                                     # single full-array block
    else:
        half = ((pl.cdiv(Bp, 2) + 7) // 8) * 8
        tile_pb = min(tile_pb, half)
    grid = (pl.cdiv(Bp, tile_pb),)   # partial last tile: reads padded, writes masked

    n_rows = Bp * pack
    cost = pl.CostEstimate(
        flops=2 * n_rows * (D * H + H * H),
        transcendentals=n_rows * H,
        bytes_accessed=int(x_packed.size * x_packed.dtype.itemsize
                           + Bp * PH * jnp.dtype(out_dtype).itemsize
                           + w1_blk.size * w1_blk.dtype.itemsize
                           + w2_blk.size * w2_blk.dtype.itemsize
                           + b1_blk.size * 4 + b2_blk.size * 4),
    )

    out = pl.pallas_call(
        decoder_kernel,
        out_shape=jax.ShapeDtypeStruct((Bp, PH), out_dtype),
        grid=grid,
        in_specs=[
            pl.BlockSpec((tile_pb, PD), lambda i: (i, 0)),   # streamed activations
            pl.BlockSpec((PD, PH), lambda i: (0, 0)),        # resident packed weights
            pl.BlockSpec((1, PH), lambda i: (0, 0)),         # resident packed bias
            pl.BlockSpec((PH, PH), lambda i: (0, 0)),        # resident packed weights
            pl.BlockSpec((1, PH), lambda i: (0, 0)),         # resident packed bias
        ],
        out_specs=pl.BlockSpec((tile_pb, PH), lambda i: (i, 0)),
        compiler_params=pltpu.CompilerParams(
            dimension_semantics=("parallel",),        # shard batch grid across TCs
            vmem_limit_bytes=32 * 1024 * 1024,        # explicit (> v5e 16 MiB default)
        ),
        cost_estimate=cost,
    )(x_packed, w1_blk, b1_blk, w2_blk, b2_blk)

    out = out.reshape(Bp * pack, H)                   # contiguous un-pack (free)
    return out[:B] if pad_rows else out


def init_params(key, latent_size, hidden_size):
    """Deterministic parameter init mirroring the PyTorch module:
    xavier_normal for weights, PyTorch default uniform for biases.
    Returned in PyTorch (out_features, in_features) layout."""
    k1, k2, k3, k4 = jax.random.split(key, 4)
    std = (2.0 / (latent_size + hidden_size)) ** 0.5
    w1 = std * jax.random.normal(k1, (hidden_size, latent_size), jnp.float32)
    w2 = std * jax.random.normal(k2, (hidden_size, latent_size), jnp.float32)
    bound = 1.0 / (latent_size ** 0.5)
    b1 = jax.random.uniform(k3, (hidden_size,), jnp.float32, -bound, bound)
    b2 = jax.random.uniform(k4, (hidden_size,), jnp.float32, -bound, bound)
    return w1, b1, w2, b2


def decoder_ref(x, w1, b1, w2, b2):
    """Pure-JAX f32 reference matching PyTorch semantics."""
    h = jnp.tanh(x @ w1.T + b1)
    return h @ w2.T + b2


if __name__ == "__main__":
    latent_size = 32
    hidden_size = 32          # must equal latent_size (see NOTE above)

    key = jax.random.PRNGKey(0)
    kx1, kx2, kp = jax.random.split(key, 3)
    w1, b1, w2, b2 = init_params(kp, latent_size, hidden_size)

    # One-time parameter prep (transpose + lane-pack + bf16 cast), off hot path.
    params = prepare_decoder_params(w1, b1, w2, b2)

    # batch=8: tiny single-block case.  batch=100: multi-step grid with a
    # partial (masked) last tile.  Both small shapes.
    for batch, kx in ((8, kx1), (100, kx2)):
        x = jax.random.normal(kx, (batch, latent_size), jnp.float32)
        out = jax.block_until_ready(decoder_forward(x, *params))
        ref = decoder_ref(x, w1, b1, w2, b2)
        assert out.shape == (batch, hidden_size)
        # bf16 weights / activations with f32 accumulation -> loosened tolerance.
        assert jnp.allclose(out, ref, atol=5e-2, rtol=5e-2), (
            batch, float(jnp.max(jnp.abs(out - ref))))

    print("KERNEL_OK")
</pallas_src>

<mosaic_0001>
module attributes {stable_mosaic.version = 11 : i64} {
  func.func @decoder_kernel(%arg0: i32, %arg1: memref<2x128xf32, #tpu.memory_space<vmem>>, %arg2: memref<128x128xbf16, #tpu.memory_space<vmem>>, %arg3: memref<1x128xf32, #tpu.memory_space<vmem>>, %arg4: memref<128x128xbf16, #tpu.memory_space<vmem>>, %arg5: memref<1x128xf32, #tpu.memory_space<vmem>>, %arg6: memref<2x128xf32, #tpu.memory_space<vmem>>) attributes {dimension_semantics = [#tpu.dimension_semantics<parallel>], iteration_bounds = array<i64: 1>, scalar_prefetch = 0 : i64, scratch_operands = 0 : i64, tpu.core_type = #tpu.core_type<tc>, window_params = [{transform_indices = @transform_0, window_bounds = array<i64: 2, 128>}, {pipeline_mode = #tpu.pipeline_mode<synchronous>, transform_indices = @transform_1, window_bounds = array<i64: 128, 128>}, {pipeline_mode = #tpu.pipeline_mode<synchronous>, transform_indices = @transform_2, window_bounds = array<i64: 1, 128>}, {pipeline_mode = #tpu.pipeline_mode<synchronous>, transform_indices = @transform_3, window_bounds = array<i64: 128, 128>}, {pipeline_mode = #tpu.pipeline_mode<synchronous>, transform_indices = @transform_4, window_bounds = array<i64: 1, 128>}, {transform_indices = @transform_5, window_bounds = array<i64: 2, 128>}]} {
    %c0 = arith.constant 0 : index
    %c0_0 = arith.constant 0 : index
    %0 = vector.load %arg1[%c0, %c0_0] : memref<2x128xf32, #tpu.memory_space<vmem>>, vector<2x128xf32>
    %1 = arith.truncf %0 : vector<2x128xf32> to vector<2x128xbf16>
    %c0_1 = arith.constant 0 : index
    %c0_2 = arith.constant 0 : index
    %2 = vector.load %arg2[%c0_1, %c0_2] : memref<128x128xbf16, #tpu.memory_space<vmem>>, vector<128x128xbf16>
    %cst = arith.constant dense<0.000000e+00> : vector<2x128xf32>
    %3 = tpu.matmul %1, %2, %cst {dimension_numbers = #tpu.dot_dimension_numbers<[1], [0], [0], [1], [0, 0, 1, 1], [], []>} : vector<2x128xbf16>, vector<128x128xbf16>, vector<2x128xf32> -> vector<2x128xf32>
    %c0_3 = arith.constant 0 : index
    %c0_4 = arith.constant 0 : index
    %4 = vector.load %arg3[%c0_3, %c0_4] : memref<1x128xf32, #tpu.memory_space<vmem>>, vector<1x128xf32>
    %5 = vector.broadcast %4 : vector<1x128xf32> to vector<2x128xf32>
    %6 = arith.addf %3, %5 : vector<2x128xf32>
    %7 = math.tanh %6 : vector<2x128xf32>
    %8 = arith.truncf %7 : vector<2x128xf32> to vector<2x128xbf16>
    %c0_5 = arith.constant 0 : index
    %c0_6 = arith.constant 0 : index
    %9 = vector.load %arg4[%c0_5, %c0_6] : memref<128x128xbf16, #tpu.memory_space<vmem>>, vector<128x128xbf16>
    %cst_7 = arith.constant dense<0.000000e+00> : vector<2x128xf32>
    %10 = tpu.matmul %8, %9, %cst_7 {dimension_numbers = #tpu.dot_dimension_numbers<[1], [0], [0], [1], [0, 0, 1, 1], [], []>} : vector<2x128xbf16>, vector<128x128xbf16>, vector<2x128xf32> -> vector<2x128xf32>
    %c0_8 = arith.constant 0 : index
    %c0_9 = arith.constant 0 : index
    %11 = vector.load %arg5[%c0_8, %c0_9] : memref<1x128xf32, #tpu.memory_space<vmem>>, vector<1x128xf32>
    %12 = vector.broadcast %11 : vector<1x128xf32> to vector<2x128xf32>
    %13 = arith.addf %10, %12 : vector<2x128xf32>
    %c0_10 = arith.constant 0 : index
    %c0_11 = arith.constant 0 : index
    %14 = vector.load %arg6[%c0_10, %c0_11] : memref<2x128xf32, #tpu.memory_space<vmem>>, vector<2x128xf32>
    tpu.vector_store %arg6[%c0_10, %c0_11], %13 {strides = array<i32>} : memref<2x128xf32, #tpu.memory_space<vmem>>, vector<2x128xf32>,
    return
  }
  func.func @transform_0(%arg0: i32) -> (i32, i32) {
    %c0_i32 = arith.constant 0 : i32
    %c0_i32_0 = arith.constant 0 : i32
    return %arg0, %c0_i32 : i32, i32
  }
  func.func @transform_1(%arg0: i32) -> (i32, i32) {
    %c0_i32 = arith.constant 0 : i32
    %c0_i32_0 = arith.constant 0 : i32
    %c0_i32_1 = arith.constant 0 : i32
    return %c0_i32, %c0_i32_0 : i32, i32
  }
  func.func @transform_2(%arg0: i32) -> (i32, i32) {
    %c0_i32 = arith.constant 0 : i32
    %c0_i32_0 = arith.constant 0 : i32
    %c0_i32_1 = arith.constant 0 : i32
    return %c0_i32, %c0_i32_0 : i32, i32
  }
  func.func @transform_3(%arg0: i32) -> (i32, i32) {
    %c0_i32 = arith.constant 0 : i32
    %c0_i32_0 = arith.constant 0 : i32
    %c0_i32_1 = arith.constant 0 : i32
    return %c0_i32, %c0_i32_0 : i32, i32
  }
  func.func @transform_4(%arg0: i32) -> (i32, i32) {
    %c0_i32 = arith.constant 0 : i32
    %c0_i32_0 = arith.constant 0 : i32
    %c0_i32_1 = arith.constant 0 : i32
    return %c0_i32, %c0_i32_0 : i32, i32
  }
  func.func @transform_5(%arg0: i32) -> (i32, i32) {
    %c0_i32 = arith.constant 0 : i32
    %c0_i32_0 = arith.constant 0 : i32
    return %arg0, %c0_i32 : i32, i32
  }
}

</mosaic_0001>

<llo_original>
// kernel: tpu_custom_call.1
$region0: #{tpu_custom_call.1}
  #allocation0 [shape = 'u32[]', space=smem, size = 0x4, offset = 0x4, fixed_abs, tag = 'smem constant byte address 0x4 - core index']
  #allocation1 [shape = 'u32[144,128]{1,0:T(1,128)}', space=vmem, size = 0x12000, scoped, tag = 'internal scratch']
  %s0 = inlined_call_operand.hbm [shape: f32[2,128], index: 0, kind: input, shape index: {}]
  %s1 = inlined_call_operand.hbm [shape: bf16[128,128], index: 1, kind: input, shape index: {}]
  %s2 = inlined_call_operand.vmem [shape: f32[1,128], index: 2, kind: input, shape index: {}]
  %s3 = inlined_call_operand.hbm [shape: bf16[128,128], index: 3, kind: input, shape index: {}]
  %s4 = inlined_call_operand.vmem [shape: f32[1,128], index: 4, kind: input, shape index: {}]
  %s5 = inlined_call_operand.hbm [shape: f32[2,128], index: 5, kind: output, shape index: {}]
  %s6 = sld [smem:[#allocation0]]
  $region42: #{tpu_custom_call.1} parent=0
    _
  %s8 = ssub.s32 1, %s6
  %s9 = scalar_select 0, %s8, %s6
  $region1: #{tpu_custom_call.1} parent=0
    #allocation2 [shape = 'u8[1024]{0}', space=vmem, size = 0x400, scoped, tag = 'input window, operand 0, single buffered']
    #allocation3 [shape = 's32[1]{0}', space=sflag, size = 0x4, scoped, tag = 'scoped memory for tpu_custom_call.1']
    #allocation4 [shape = 's32[1]{0}', space=sflag, size = 0x4, scoped, tag = 'scoped memory for tpu_custom_call.1']
    #allocation5 [shape = 'u8[32768]{0}', space=vmem, size = 0x8000, scoped, tag = 'input window, operand 1, single buffered']
    #allocation6 [shape = 's32[1]{0}', space=sflag, size = 0x4, scoped, tag = 'scoped memory for tpu_custom_call.1']
    #allocation7 [shape = 'u8[32768]{0}', space=vmem, size = 0x8000, scoped, tag = 'input window, operand 3, single buffered']
    #allocation8 [shape = 'u8[1024]{0}', space=vmem, size = 0x400, scoped, tag = 'output window, operand 0, single buffered']
    %10 = vsyncpa [#allocation3], 0
    %11 = vsyncpa [#allocation6], 0
    %12 = vsyncpa [#allocation4], 0
    // Predicated region
    $region2: #{tpu_custom_call.1} parent=1 // pred_check
      _
    $region3: #{tpu_custom_call.1} parent=1 // pred_check_branch
      %14 = sbr.rel (0) target = $region5
    $region4: #{tpu_custom_call.1} parent=1 // pred_region
      %s16 = ssub.s32 32, 32
      %17 = vsyncadd [#allocation3], %s16
      %s19 = sshll.u32 [#allocation2], 4
      %s20 = int_to_ptr.vmem [resolvable:$true] %s19
      %22 = dma.hbm_to_vmem [thread:$0]  %s0, 32, %s20, [#allocation3]
    $region5: #{tpu_custom_call.1} parent=1 // pred_fallthru
      _
    // Predicated region
    $region6: #{tpu_custom_call.1} parent=1 // pred_check
      _
    $region7: #{tpu_custom_call.1} parent=1 // pred_check_branch
      %24 = sbr.rel (0) target = $region9
    $region8: #{tpu_custom_call.1} parent=1 // pred_region
      %s26 = ssub.s32 1024, 1024
      %27 = vsyncadd [#allocation6], %s26
      %s28 = sshll.u32 [#allocation5], 4
      %s29 = int_to_ptr.vmem [resolvable:$true] %s28
      %34 = dma.hbm_to_vmem [thread:$0]  %s1, 1024, %s29, [#allocation6], 64, 64, 4
    $region9: #{tpu_custom_call.1} parent=1 // pred_fallthru
      _
    // Predicated region
    $region10: #{tpu_custom_call.1} parent=1 // pred_check
      _
    $region11: #{tpu_custom_call.1} parent=1 // pred_check_branch
      %36 = sbr.rel (0) target = $region13
    $region12: #{tpu_custom_call.1} parent=1 // pred_region
      _
    $region13: #{tpu_custom_call.1} parent=1 // pred_fallthru
      _
    // Predicated region
    $region14: #{tpu_custom_call.1} parent=1 // pred_check
      _
    $region15: #{tpu_custom_call.1} parent=1 // pred_check_branch
      %38 = sbr.rel (0) target = $region17
    $region16: #{tpu_custom_call.1} parent=1 // pred_region
      %s40 = ssub.s32 1024, 1024
      %41 = vsyncadd [#allocation6], %s40
      %s42 = sshll.u32 [#allocation7], 4
      %s43 = int_to_ptr.vmem [resolvable:$true] %s42
      %48 = dma.hbm_to_vmem [thread:$0]  %s3, 1024, %s43, [#allocation6], 64, 64, 4
    $region17: #{tpu_custom_call.1} parent=1 // pred_fallthru
      _
    // Predicated region
    $region18: #{tpu_custom_call.1} parent=1 // pred_check
      _
    $region19: #{tpu_custom_call.1} parent=1 // pred_check_branch
      %50 = sbr.rel (0) target = $region21
    $region20: #{tpu_custom_call.1} parent=1 // pred_region
      _
    $region21: #{tpu_custom_call.1} parent=1 // pred_fallthru
      _
    // Predicated region
    $region22: #{tpu_custom_call.1} parent=1 // pred_check
      _
    $region23: #{tpu_custom_call.1} parent=1 // pred_check_branch
      %52 = sbr.rel (0) target = $region25
    $region24: #{tpu_custom_call.1} parent=1 // pred_region
      %53 = dma.done [#allocation3], 32
    $region25: #{tpu_custom_call.1} parent=1 // pred_fallthru
      _
    // Predicated region
    $region26: #{tpu_custom_call.1} parent=1 // pred_check
      _
    $region27: #{tpu_custom_call.1} parent=1 // pred_check_branch
      %55 = sbr.rel (0) target = $region29
    $region28: #{tpu_custom_call.1} parent=1 // pred_region
      %56 = dma.done [#allocation6], 1024
    $region29: #{tpu_custom_call.1} parent=1 // pred_fallthru
      _
    // Predicated region
    $region30: #{tpu_custom_call.1} parent=1 // pred_check
      _
    $region31: #{tpu_custom_call.1} parent=1 // pred_check_branch
      %58 = sbr.rel (0) target = $region33
    $region32: #{tpu_custom_call.1} parent=1 // pred_region
      %59 = dma.done [#allocation6], 1024
    $region33: #{tpu_custom_call.1} parent=1 // pred_fallthru
      _
    %v61 = vld [vmem:[#allocation2] sm:$0x3]
    %v62 = vpack.c.bf16 %v61, %v61
    %v63 = vld [vmem:[#allocation5] sm:$0xf]
    %v64 = vld [vmem:[#allocation5 + $0x4] sm:$0xf]
    %v65 = vld [vmem:[#allocation5 + $0x8] sm:$0xf]
    %v66 = vld [vmem:[#allocation5 + $0xc] sm:$0xf]
    %v67 = vld [vmem:[#allocation5 + $0x10] sm:$0xf]
    %v68 = vld [vmem:[#allocation5 + $0x14] sm:$0xf]
    %v69 = vld [vmem:[#allocation5 + $0x18] sm:$0xf]
    %v70 = vld [vmem:[#allocation5 + $0x1c] sm:$0xf]
    %v71 = vld [vmem:[#allocation5 + $0x20] sm:$0xf]
    %v72 = vld [vmem:[#allocation5 + $0x24] sm:$0xf]
    %v73 = vld [vmem:[#allocation5 + $0x28] sm:$0xf]
    %v74 = vld [vmem:[#allocation5 + $0x2c] sm:$0xf]
    %v75 = vld [vmem:[#allocation5 + $0x30] sm:$0xf]
    %v76 = vld [vmem:[#allocation5 + $0x34] sm:$0xf]
    %v77 = vld [vmem:[#allocation5 + $0x38] sm:$0xf]
    %v78 = vld [vmem:[#allocation5 + $0x3c] sm:$0xf]
    %v79 = vld [vmem:[%s2] sm:$0x1]
    %v81 = vlaneseq
    %v82 = vshrl.u32 %v81, 7
    %v83 = vsub.s32 0, %v82
    %v84 = vrot.slane %v79, %v83
    %v102 = vunpack.c.l.b16 %v63
    %v103 = vunpack.c.l.b16 %v64
    %v104 = vunpack.c.l.b16 %v65
    %v105 = vunpack.c.l.b16 %v66
    %v106 = vunpack.c.l.b16 %v67
    %v107 = vunpack.c.l.b16 %v68
    %v108 = vunpack.c.l.b16 %v69
    %v109 = vunpack.c.l.b16 %v70
    %v110 = vunpack.c.l.b16 %v71
    %v111 = vunpack.c.l.b16 %v72
    %v112 = vunpack.c.l.b16 %v73
    %v113 = vunpack.c.l.b16 %v74
    %v114 = vunpack.c.l.b16 %v75
    %v115 = vunpack.c.l.b16 %v76
    %v116 = vunpack.c.l.b16 %v77
    %v117 = vunpack.c.l.b16 %v78
    %v118 = vpack.c.b16 %v103, %v102
    %v119 = vpack.c.b16 %v105, %v104
    %v120 = vpack.c.b16 %v107, %v106
    %v121 = vpack.c.b16 %v109, %v108
    %v122 = vpack.c.b16 %v111, %v110
    %v123 = vpack.c.b16 %v113, %v112
    %v124 = vpack.c.b16 %v115, %v114
    %v125 = vpack.c.b16 %v117, %v116
    %134 = vmatprep.subr.bf16.mxu0 0
    %135 = vmatpush1.bf16.msra.mxu0 %v125
    %136 = vmatprep.subr.bf16.mxu0 0
    %137 = vmatpush1.bf16.msra.mxu0 %v124
    %138 = vmatprep.subr.bf16.mxu0 0
    %139 = vmatpush1.bf16.msra.mxu0 %v123
    %140 = vmatprep.subr.bf16.mxu0 0
    %141 = vmatpush1.bf16.msra.mxu0 %v122
    %142 = vmatprep.subr.bf16.mxu0 0
    %143 = vmatpush1.bf16.msra.mxu0 %v121
    %144 = vmatprep.subr.bf16.mxu0 0
    %145 = vmatpush1.bf16.msra.mxu0 %v120
    %146 = vmatprep.subr.bf16.mxu0 0
    %147 = vmatpush1.bf16.msra.mxu0 %v119
    %148 = vmatprep.subr.bf16.mxu0 0
    %149 = vmatpush1.bf16.msra.mxu0 %v118
    %150 = vmatprep.subr.bf16.mxu0 0
    %151 = vmatpush2.bf16.msra.mxu0 0
    %152 = vmatprep.subr.bf16.mxu0 0
    %153 = vmatpush2.bf16.msra.mxu0 0
    %154 = vmatprep.subr.bf16.mxu0 0
    %155 = vmatpush2.bf16.msra.mxu0 0
    %156 = vmatprep.subr.bf16.mxu0 0
    %157 = vmatpush2.bf16.msra.mxu0 0
    %158 = vmatprep.subr.bf16.mxu0 0
    %159 = vmatpush2.bf16.msra.mxu0 0
    %160 = vmatprep.subr.bf16.mxu0 0
    %161 = vmatpush2.bf16.msra.mxu0 0
    %162 = vmatprep.subr.bf16.mxu0 0
    %163 = vmatpush2.bf16.msra.mxu0 0
    %164 = vmatprep.subr.bf16.mxu0 0
    %165 = vmatpush2.bf16.msra.mxu0 0
    %166 = vmatprep.mubr.bf16.mxu0 0
    %167 = vmatmul.mubr.bf16.gmra.mxu0 %v62
    %v168 = vpop.f32.mrf.mxu0
    %v169 = vadd.f32 %v84, %v168
    %v170 = vpop.f32.mrf.mxu0
    %v171 = vpop.f32.mrf.mxu0
    %v172 = vpop.f32.mrf.mxu0
    %173 = vdwg.mxu0
    %v174 = vtanh.pop %v169
    %v175 = vpack.c.bf16 %v174, %v174
    %v176 = vld [vmem:[#allocation7] sm:$0xf]
    %v177 = vld [vmem:[#allocation7 + $0x4] sm:$0xf]
    %v178 = vld [vmem:[#allocation7 + $0x8] sm:$0xf]
    %v179 = vld [vmem:[#allocation7 + $0xc] sm:$0xf]
    %v180 = vld [vmem:[#allocation7 + $0x10] sm:$0xf]
    %v181 = vld [vmem:[#allocation7 + $0x14] sm:$0xf]
    %v182 = vld [vmem:[#allocation7 + $0x18] sm:$0xf]
    %v183 = vld [vmem:[#allocation7 + $0x1c] sm:$0xf]
    %v184 = vld [vmem:[#allocation7 + $0x20] sm:$0xf]
    %v185 = vld [vmem:[#allocation7 + $0x24] sm:$0xf]
    %v186 = vld [vmem:[#allocation7 + $0x28] sm:$0xf]
    %v187 = vld [vmem:[#allocation7 + $0x2c] sm:$0xf]
    %v188 = vld [vmem:[#allocation7 + $0x30] sm:$0xf]
    %v189 = vld [vmem:[#allocation7 + $0x34] sm:$0xf]
    %v190 = vld [vmem:[#allocation7 + $0x38] sm:$0xf]
    %v191 = vld [vmem:[#allocation7 + $0x3c] sm:$0xf]
    %v192 = vld [vmem:[%s4] sm:$0x1]
    %v194 = vlaneseq
    %v195 = vshrl.u32 %v194, 7
    %v196 = vsub.s32 0, %v195
    %v197 = vrot.slane %v192, %v196
    %v215 = vunpack.c.l.b16 %v176
    %v216 = vunpack.c.l.b16 %v177
    %v217 = vunpack.c.l.b16 %v178
    %v218 = vunpack.c.l.b16 %v179
    %v219 = vunpack.c.l.b16 %v180
    %v220 = vunpack.c.l.b16 %v181
    %v221 = vunpack.c.l.b16 %v182
    %v222 = vunpack.c.l.b16 %v183
    %v223 = vunpack.c.l.b16 %v184
    %v224 = vunpack.c.l.b16 %v185
    %v225 = vunpack.c.l.b16 %v186
    %v226 = vunpack.c.l.b16 %v187
    %v227 = vunpack.c.l.b16 %v188
    %v228 = vunpack.c.l.b16 %v189
    %v229 = vunpack.c.l.b16 %v190
    %v230 = vunpack.c.l.b16 %v191
    %v231 = vpack.c.b16 %v216, %v215
    %v232 = vpack.c.b16 %v218, %v217
    %v233 = vpack.c.b16 %v220, %v219
    %v234 = vpack.c.b16 %v222, %v221
    %v235 = vpack.c.b16 %v224, %v223
    %v236 = vpack.c.b16 %v226, %v225
    %v237 = vpack.c.b16 %v228, %v227
    %v238 = vpack.c.b16 %v230, %v229
    %247 = vmatprep.subr.bf16.mxu0 0
    %248 = vmatpush1.bf16.msra.mxu0 %v238
    %249 = vmatprep.subr.bf16.mxu0 0
    %250 = vmatpush1.bf16.msra.mxu0 %v237
    %251 = vmatprep.subr.bf16.mxu0 0
    %252 = vmatpush1.bf16.msra.mxu0 %v236
    %253 = vmatprep.subr.bf16.mxu0 0
    %254 = vmatpush1.bf16.msra.mxu0 %v235
    %255 = vmatprep.subr.bf16.mxu0 0
    %256 = vmatpush1.bf16.msra.mxu0 %v234
    %257 = vmatprep.subr.bf16.mxu0 0
    %258 = vmatpush1.bf16.msra.mxu0 %v233
    %259 = vmatprep.subr.bf16.mxu0 0
    %260 = vmatpush1.bf16.msra.mxu0 %v232
    %261 = vmatprep.subr.bf16.mxu0 0
    %262 = vmatpush1.bf16.msra.mxu0 %v231
    %263 = vmatprep.subr.bf16.mxu0 0
    %264 = vmatpush2.bf16.msra.mxu0 0
    %265 = vmatprep.subr.bf16.mxu0 0
    %266 = vmatpush2.bf16.msra.mxu0 0
    %267 = vmatprep.subr.bf16.mxu0 0
    %268 = vmatpush2.bf16.msra.mxu0 0
    %269 = vmatprep.subr.bf16.mxu0 0
    %270 = vmatpush2.bf16.msra.mxu0 0
    %271 = vmatprep.subr.bf16.mxu0 0
    %272 = vmatpush2.bf16.msra.mxu0 0
    %273 = vmatprep.subr.bf16.mxu0 0
    %274 = vmatpush2.bf16.msra.mxu0 0
    %275 = vmatprep.subr.bf16.mxu0 0
    %276 = vmatpush2.bf16.msra.mxu0 0
    %277 = vmatprep.subr.bf16.mxu0 0
    %278 = vmatpush2.bf16.msra.mxu0 0
    %279 = vmatprep.mubr.bf16.mxu0 0
    %280 = vmatmul.mubr.bf16.gmra.mxu0 %v175
    %v281 = vpop.f32.mrf.mxu0
    %v282 = vadd.f32 %v197, %v281
    %v283 = vpop.f32.mrf.mxu0
    %v284 = vpop.f32.mrf.mxu0
    %v285 = vpop.f32.mrf.mxu0
    %286 = vdwg.mxu0
    %287 = vst [vmem:[#allocation8] sm:$0x3] %v282
    // Predicated region
    $region34: #{tpu_custom_call.1} parent=1 // pred_check
      _
    $region35: #{tpu_custom_call.1} parent=1 // pred_check_branch
      %289 = sbr.rel (0) target = $region37
    $region36: #{tpu_custom_call.1} parent=1 // pred_region
      %s291 = ssub.s32 32, 32
      %292 = vsyncadd [#allocation4], %s291
      %s294 = sshll.u32 [#allocation8], 4
      %s295 = int_to_ptr.vmem [resolvable:$true] %s294
      %297 = dma.vmem_to_hbm [thread:$0]  %s295, 32, %s5, [#allocation4]
    $region37: #{tpu_custom_call.1} parent=1 // pred_fallthru
      _
    // Predicated region
    $region38: #{tpu_custom_call.1} parent=1 // pred_check
      _
    $region39: #{tpu_custom_call.1} parent=1 // pred_check_branch
      %299 = sbr.rel (0) target = $region41
    $region40: #{tpu_custom_call.1} parent=1 // pred_region
      %300 = dma.done [#allocation4], 32
    $region41: #{tpu_custom_call.1} parent=1 // pred_fallthru
      _
    %301 = vsyncpa [#allocation3], 1
    %302 = vsyncpa [#allocation6], 1
    %303 = vsyncpa [#allocation4], 1

</llo_original>
